<compile_context>
chip_gen: v7x
topology: tpu7x:2x2x1
jax: 0.10.0
libtpu: 0.0.40
codegen_flags: <defaults>
</compile_context>

<pallas_src>
import math

import jax
import jax.numpy as jnp
from jax.experimental import pallas as pl
from jax.experimental.pallas import tpu as pltpu


def _chip_budget():
    """(output-block byte target, vmem_limit_bytes) per TPU generation.

    v5e/v6e have 128 MiB VMEM per TensorCore -> larger blocks / limit.
    v7x (and unknown chips) get the conservative budget: 64 MiB VMEM per TC,
    so the double-buffered working set (~4x the output block) stays <= ~32 MiB
    and the limit leaves headroom for Mosaic internal scratch.
    """
    try:
        kind = jax.devices()[0].device_kind.lower()
    except Exception:
        kind = ""
    if ("v5" in kind) or ("v6" in kind):
        return 12 * 1024 * 1024, 96 * 1024 * 1024
    return 8 * 1024 * 1024, 48 * 1024 * 1024


def _make_kernel(offsets, widths, three_d):
    """Kernel: one direct slab store per input at its static concat offset."""
    offsets = tuple(offsets)
    widths = tuple(widths)

    def kernel(*refs):
        *in_refs, o_ref = refs
        for r, off, w in zip(in_refs, offsets, widths):
            v = r[...]
            if v.dtype != o_ref.dtype:       # no-op when dtypes already match
                v = v.astype(o_ref.dtype)
            if three_d:
                o_ref[:, off:off + w, :] = v
            else:
                o_ref[:, off:off + w] = v

    return kernel


def concat(tensors, dimension=1):
    """Pallas equivalent of torch.cat(tensors, dim=dimension)."""
    tensors = list(tensors)
    assert len(tensors) >= 1, "concat needs at least one tensor"
    rank = tensors[0].ndim
    d = dimension % rank  # handle negative dims like torch
    base = tuple(tensors[0].shape)
    for t in tensors:
        s = tuple(t.shape)
        assert len(s) == rank and s[:d] == base[:d] and s[d + 1:] == base[d + 1:], (
            f"shape mismatch for concat along dim {d}: {s} vs {base}")

    out_dtype = jnp.result_type(*[t.dtype for t in tensors])
    itemsize = jnp.dtype(out_dtype).itemsize

    R = math.prod(base[:d])
    T = math.prod(base[d + 1:])
    C_total = sum(int(t.shape[d]) for t in tensors)
    out_shape_full = base[:d] + (C_total,) + base[d + 1:]

    # Degenerate / zero-size cases: nothing to copy.
    if R == 0 or T == 0 or C_total == 0:
        return jnp.zeros(out_shape_full, out_dtype)

    # Zero-width inputs are legal for torch.cat but contribute nothing.
    tensors = [t for t in tensors if int(t.shape[d]) > 0]
    Cs = [int(t.shape[d]) for t in tensors]
    offsets = [0]
    for c in Cs[:-1]:
        offsets.append(offsets[-1] + c)

    block_target, vmem_limit = _chip_budget()
    bytes_accessed = (sum(t.size * t.dtype.itemsize for t in tensors)
                      + R * C_total * T * itemsize)

    three_d = T >= 128

    if three_d:
        # 3-D view: channel axis (full extent) on sublanes, trailing on lanes.
        ins = [t.reshape(R, c, T) for t, c in zip(tensors, Cs)]

        # Lane tile: multiple of 128 (masked tail via cdiv) or the full extent.
        max_lane = max(128, block_target // max(1, C_total * itemsize))
        if T <= max_lane:
            tn = T                                  # full extent: always legal
        else:
            tn = max(128, (max_lane // 128) * 128)

        # Row tile (leading dim: not constrained by (8,128)).
        per_row = C_total * tn * itemsize
        tr = max(1, min(R, block_target // max(1, per_row)))
        grid = (pl.cdiv(R, tr), pl.cdiv(T, tn))

        # Keep >= 2 parallel steps so v7x's two TensorCores both get work.
        if grid[0] * grid[1] == 1 and R >= 2:
            tr = -(-R // 2)
            grid = (pl.cdiv(R, tr), grid[1])

        in_specs = [pl.BlockSpec((tr, c, tn), lambda b, s: (b, 0, s)) for c in Cs]
        out_specs = pl.BlockSpec((tr, C_total, tn), lambda b, s: (b, 0, s))
        kernel = _make_kernel(offsets, Cs, three_d=True)
        flat_shape = (R, C_total, T)
    else:
        # Small trailing extent: fold (channel, trailing) into one wide lane
        # axis so every store is lane-dense (avoids vst.msk with lane width < 128).
        ins = [t.reshape(R, c * T) for t, c in zip(tensors, Cs)]
        lane_widths = [c * T for c in Cs]
        lane_offsets = [o * T for o in offsets]
        W = C_total * T

        per_row = W * itemsize
        tr = max(1, min(R, block_target // max(1, per_row)))
        if tr < R:
            # Sublane axis: must be a multiple of 8 unless it is the full extent.
            tr = max(8, (tr // 8) * 8) if R >= 8 else R
            tr = min(tr, R)
        grid = (pl.cdiv(R, tr),)

        if grid[0] == 1 and R >= 16:          # give v7x's 2nd TC something to do
            tr = -(-(-(-R // 2)) // 8) * 8
            grid = (pl.cdiv(R, tr),)

        in_specs = [pl.BlockSpec((tr, w), lambda b: (b, 0)) for w in lane_widths]
        out_specs = pl.BlockSpec((tr, W), lambda b: (b, 0))
        kernel = _make_kernel(lane_offsets, lane_widths, three_d=False)
        flat_shape = (R, W)
        # TODO(synk): for extremely wide concats (W * 8 rows exceeding the VMEM
        # budget) split inputs into channel groups across multiple pallas_calls.

    out_flat = pl.pallas_call(
        kernel,
        out_shape=jax.ShapeDtypeStruct(flat_shape, out_dtype),
        grid_spec=pl.GridSpec(grid=grid, in_specs=in_specs, out_specs=out_specs),
        compiler_params=pltpu.CompilerParams(
            dimension_semantics=tuple("parallel" for _ in grid),
            vmem_limit_bytes=vmem_limit,
        ),
        cost_estimate=pl.CostEstimate(
            flops=0, transcendentals=0, bytes_accessed=int(bytes_accessed)),
    )(*ins)

    return out_flat.reshape(out_shape_full)


class Concat:
    """Mirror of the PyTorch module: forward(x) = torch.cat(x, dim=self.d)."""

    def __init__(self, dimension=1):
        self.d = dimension

    def __call__(self, x):
        return concat(x, self.d)


if __name__ == "__main__":
    key = jax.random.PRNGKey(0)
    k1, k2, k3, k4 = jax.random.split(key, 4)

    # Two NCHW feature maps with different channel counts, concatenated on dim 1
    # (T = 256 >= 128 -> 3-D lane-tiled path).
    a = jax.random.normal(k1, (2, 8, 16, 16), dtype=jnp.float32)
    b = jax.random.normal(k2, (2, 16, 16, 16), dtype=jnp.float32)
    mod = Concat(dimension=1)
    out = jax.block_until_ready(mod([a, b]))
    ref = jnp.concatenate([a, b], axis=1)
    assert out.shape == ref.shape and out.dtype == ref.dtype
    assert jnp.array_equal(out, ref)

    # Last-dim concat with tiny trailing extent (T = 1 -> lane-dense 2-D path).
    c = jax.random.normal(k3, (2, 4, 16, 3), dtype=jnp.float32)
    d = jax.random.normal(k4, (2, 4, 16, 5), dtype=jnp.float32)
    out2 = jax.block_until_ready(Concat(dimension=-1)([c, d]))
    ref2 = jnp.concatenate([c, d], axis=-1)
    assert out2.shape == ref2.shape and out2.dtype == ref2.dtype
    assert jnp.array_equal(out2, ref2)

    print("KERNEL_OK")
</pallas_src>

<mosaic_0001>
module attributes {stable_mosaic.version = 11 : i64} {
  func.func @kernel(%arg0: i32, %arg1: i32, %arg2: memref<1x8x256xf32, #tpu.memory_space<vmem>>, %arg3: memref<1x16x256xf32, #tpu.memory_space<vmem>>, %arg4: memref<1x24x256xf32, #tpu.memory_space<vmem>>) attributes {dimension_semantics = [#tpu.dimension_semantics<parallel>, #tpu.dimension_semantics<parallel>], iteration_bounds = array<i64: 2, 1>, scalar_prefetch = 0 : i64, scratch_operands = 0 : i64, tpu.core_type = #tpu.core_type<tc>, window_params = [{transform_indices = @transform_0, window_bounds = array<i64: 1, 8, 256>}, {transform_indices = @transform_1, window_bounds = array<i64: 1, 16, 256>}, {transform_indices = @transform_2, window_bounds = array<i64: 1, 24, 256>}]} {
    %c0 = arith.constant 0 : index
    %c0_0 = arith.constant 0 : index
    %c0_1 = arith.constant 0 : index
    %0 = vector.load %arg2[%c0, %c0_0, %c0_1] : memref<1x8x256xf32, #tpu.memory_space<vmem>>, vector<1x8x256xf32>
    %c0_2 = arith.constant 0 : index
    %c0_3 = arith.constant 0 : index
    %c0_4 = arith.constant 0 : index
    %1 = vector.load %arg4[%c0_2, %c0_3, %c0_4] : memref<1x24x256xf32, #tpu.memory_space<vmem>>, vector<1x8x256xf32>
    tpu.vector_store %arg4[%c0_2, %c0_3, %c0_4], %0 {strides = array<i32>} : memref<1x24x256xf32, #tpu.memory_space<vmem>>, vector<1x8x256xf32>,
    %c0_5 = arith.constant 0 : index
    %c0_6 = arith.constant 0 : index
    %c0_7 = arith.constant 0 : index
    %2 = vector.load %arg3[%c0_5, %c0_6, %c0_7] : memref<1x16x256xf32, #tpu.memory_space<vmem>>, vector<1x16x256xf32>
    %c0_8 = arith.constant 0 : index
    %c8 = arith.constant 8 : index
    %c0_9 = arith.constant 0 : index
    %3 = vector.load %arg4[%c0_8, %c8, %c0_9] : memref<1x24x256xf32, #tpu.memory_space<vmem>>, vector<1x16x256xf32>
    tpu.vector_store %arg4[%c0_8, %c8, %c0_9], %2 {strides = array<i32>} : memref<1x24x256xf32, #tpu.memory_space<vmem>>, vector<1x16x256xf32>,
    return
  }
  func.func @transform_0(%arg0: i32, %arg1: i32) -> (i32, i32, i32) {
    %c0_i32 = arith.constant 0 : i32
    %c0_i32_0 = arith.constant 0 : i32
    return %arg0, %c0_i32, %arg1 : i32, i32, i32
  }
  func.func @transform_1(%arg0: i32, %arg1: i32) -> (i32, i32, i32) {
    %c0_i32 = arith.constant 0 : i32
    %c0_i32_0 = arith.constant 0 : i32
    return %arg0, %c0_i32, %arg1 : i32, i32, i32
  }
  func.func @transform_2(%arg0: i32, %arg1: i32) -> (i32, i32, i32) {
    %c0_i32 = arith.constant 0 : i32
    %c0_i32_0 = arith.constant 0 : i32
    return %arg0, %c0_i32, %arg1 : i32, i32, i32
  }
}

</mosaic_0001>

<llo_original>
// kernel: tpu_custom_call.1
$region0: #{tpu_custom_call.1}
  #allocation0 [shape = 'u32[]', space=smem, size = 0x4, offset = 0x4, fixed_abs, tag = 'smem constant byte address 0x4 - core index']
  #allocation1 [shape = 'u32[144,128]{1,0:T(1,128)}', space=vmem, size = 0x12000, scoped, tag = 'internal scratch']
  %s0 = inlined_call_operand.hbm [shape: f32[2,8,256], index: 0, kind: input, shape index: {}]
  %s1 = inlined_call_operand.hbm [shape: f32[2,16,256], index: 1, kind: input, shape index: {}]
  %s2 = inlined_call_operand.hbm [shape: f32[2,24,256], index: 2, kind: output, shape index: {}]
  %s3 = sld [smem:[#allocation0]]
  $region49: #{tpu_custom_call.1} parent=0
    _
  %s5 = ssub.s32 1, %s3
  %s6 = scalar_select 0, %s5, %s3
  $region1: #{tpu_custom_call.1} parent=0
    #allocation2 [shape = 'u8[16384]{0}', space=vmem, size = 0x4000, scoped, tag = 'input window, operand 0']
    #allocation3 [shape = 's32[2]{0}', space=sflag, size = 0x8, scoped, tag = 'scoped memory for tpu_custom_call.1']
    #allocation4 [shape = 's32[2]{0}', space=sflag, size = 0x8, scoped, tag = 'scoped memory for tpu_custom_call.1']
    #allocation5 [shape = 'u8[32768]{0}', space=vmem, size = 0x8000, scoped, tag = 'input window, operand 1']
    #allocation6 [shape = 's32[2]{0}', space=sflag, size = 0x8, scoped, tag = 'scoped memory for tpu_custom_call.1']
    #allocation7 [shape = 'u8[49152]{0}', space=vmem, size = 0xc000, scoped, tag = 'output window, operand 0']
    %7 = vsyncpa [#allocation3], 0
    %s8 = scalar_lea.sflag [#allocation3], 1
    %9 = vsyncpa %s8, 0
    %10 = vsyncpa [#allocation6], 0
    %s11 = scalar_lea.sflag [#allocation6], 1
    %12 = vsyncpa %s11, 0
    %13 = vsyncpa [#allocation4], 0
    %s14 = scalar_lea.sflag [#allocation4], 1
    %15 = vsyncpa %s14, 0
    loop: start=0, step=1, limit=4
    $region2: #{tpu_custom_call.1} parent=1 // loop_pre_header
      _
    $region3: #{tpu_custom_call.1} parent=1 // loop_header
      %s17 = sphi 0, %s21
      %p18 = scmp.ge.s32.totalorder %s17, 4
      %s24 = sphi 0, %s36
      %s25 = sphi 0, %s32
      %s26 = sphi 0, %s24
      %s27 = sphi 0, %s25
      %s28 = sphi 0, %s26
      %s29 = sphi 0, %s27
      %s41 = sphi 0, %s43
      %s44 = sphi 0, %s41
      %s45 = sphi 0, %s44
      %s61 = sphi 0, %s45
      %s69 = sphi 0, %s71
      %s72 = sphi 0, %s69
      %s73 = sphi 0, %s72
      %s89 = sphi 0, %s73
      %s97 = sphi 0, %s99
      %s100 = sphi 0, %s97
      %s101 = sphi 0, %s100
      %s117 = sphi 0, %s101
    $region4: #{tpu_custom_call.1} parent=1 // loop_header_branch
      %20 = sbr.rel (%p18) target = $region8
    $region5: #{tpu_custom_call.1} parent=1 // loop_body
      %s22 = ssub.s32 %s17, 1
      %s23 = ssub.s32 %s17, 2
      %s30 = sadd.s32 1, %s25
      %p31 = scmp.ge.s32.totalorder %s30, 1
      %s32 = scalar_select %p31, 0, %s30
      %s33 = sadd.s32 1, %s24
      %s34 = scalar_select %p31, %s33, %s24
      %p35 = scmp.ge.s32.totalorder %s34, 2
      %s36 = scalar_select %p35, 0, %s34
      %s37 = ssub.s32 %s24, %s36
      %s38 = ssub.s32 %s25, %s32
      %s39 = sor.u32 %s37, %s38
      %p40 = scmp.eq.s32.totalorder %s39, 0
      %s42 = sadd.s32 %s41, 1
      %s43 = scalar_select %p40, %s41, %s42
      %p46 = pneg %p40
      %p47 = scmp.eq.s32.totalorder %s17, 1
      %p48 = por %p46, %p47
      %p49 = scmp.ne.s32.totalorder %s41, %s44
      %p50 = scmp.eq.s32.totalorder %s17, 0
      %p51 = por %p49, %p50
      %p52 = scmp.ne.s32.totalorder %s41, %s44
      %p53 = scmp.eq.s32.totalorder %s22, 1
      %p54 = por %p52, %p53
      %p55 = scmp.ne.s32.totalorder %s44, %s45
      %p56 = scmp.eq.s32.totalorder %s22, 0
      %p57 = por %p55, %p56
      %p58 = scmp.ne.s32.totalorder %s44, %s45
      %p59 = scmp.eq.s32.totalorder %s23, 1
      %p60 = por %p58, %p59
      %p62 = scmp.ne.s32.totalorder %s45, %s61
      %p63 = scmp.eq.s32.totalorder %s23, 0
      %p64 = por %p62, %p63
      %s65 = ssub.s32 %s24, %s36
      %s66 = ssub.s32 %s25, %s32
      %s67 = sor.u32 %s65, %s66
      %p68 = scmp.eq.s32.totalorder %s67, 0
      %s70 = sadd.s32 %s69, 1
      %s71 = scalar_select %p68, %s69, %s70
      %p74 = pneg %p68
      %p75 = scmp.eq.s32.totalorder %s17, 1
      %p76 = por %p74, %p75
      %p77 = scmp.ne.s32.totalorder %s69, %s72
      %p78 = scmp.eq.s32.totalorder %s17, 0
      %p79 = por %p77, %p78
      %p80 = scmp.ne.s32.totalorder %s69, %s72
      %p81 = scmp.eq.s32.totalorder %s22, 1
      %p82 = por %p80, %p81
      %p83 = scmp.ne.s32.totalorder %s72, %s73
      %p84 = scmp.eq.s32.totalorder %s22, 0
      %p85 = por %p83, %p84
      %p86 = scmp.ne.s32.totalorder %s72, %s73
      %p87 = scmp.eq.s32.totalorder %s23, 1
      %p88 = por %p86, %p87
      %p90 = scmp.ne.s32.totalorder %s73, %s89
      %p91 = scmp.eq.s32.totalorder %s23, 0
      %p92 = por %p90, %p91
      %s93 = ssub.s32 %s24, %s36
      %s94 = ssub.s32 %s25, %s32
      %s95 = sor.u32 %s93, %s94
      %p96 = scmp.eq.s32.totalorder %s95, 0
      %s98 = sadd.s32 %s97, 1
      %s99 = scalar_select %p96, %s97, %s98
      %p102 = pneg %p96
      %p103 = scmp.eq.s32.totalorder %s17, 1
      %p104 = por %p102, %p103
      %p105 = scmp.ne.s32.totalorder %s97, %s100
      %p106 = scmp.eq.s32.totalorder %s17, 0
      %p107 = por %p105, %p106
      %p108 = scmp.ne.s32.totalorder %s97, %s100
      %p109 = scmp.eq.s32.totalorder %s22, 1
      %p110 = por %p108, %p109
      %p111 = scmp.ne.s32.totalorder %s100, %s101
      %p112 = scmp.eq.s32.totalorder %s22, 0
      %p113 = por %p111, %p112
      %p114 = scmp.ne.s32.totalorder %s100, %s101
      %p115 = scmp.eq.s32.totalorder %s23, 1
      %p116 = por %p114, %p115
      %p118 = scmp.ne.s32.totalorder %s101, %s117
      %p119 = scmp.eq.s32.totalorder %s23, 0
      %p120 = por %p118, %p119
      %p121 = scmp.le.s32.totalorder 1, %s17
      %p122 = scmp.lt.s32.totalorder %s17, 3
      %p123 = pnand %p121, %p122
      %p124 = pneg %p123
      // Predicated region
      $region9: #{tpu_custom_call.1} parent=5 // pred_check
        _
      $region10: #{tpu_custom_call.1} parent=5 // pred_check_branch
        %126 = sbr.rel (%p123) target = $region12
      $region11: #{tpu_custom_call.1} parent=5 // pred_region
        %s127 = ssub.s32 %s17, 1
      $region12: #{tpu_custom_call.1} parent=5 // pred_fallthru
        _
      %p128 = scmp.lt.s32.totalorder %s17, 2
      // Predicated region
      $region13: #{tpu_custom_call.1} parent=5 // pred_check
        %p129 = pneg %p128
      $region14: #{tpu_custom_call.1} parent=5 // pred_check_branch
        %131 = sbr.rel (%p129) target = $region16
      $region15: #{tpu_custom_call.1} parent=5 // pred_region
        // Predicated region
        $region17: #{tpu_custom_call.1} parent=15 // pred_check
          %p132 = pneg %p51
        $region18: #{tpu_custom_call.1} parent=15 // pred_check_branch
          %134 = sbr.rel (%p132) target = $region20
        $region19: #{tpu_custom_call.1} parent=15 // pred_region
          %s135 = sand.u32 %s41, 1
          %s136 = scalar_lea.sflag [#allocation3], %s135
          %s137 = sand.u32 %s41, 1
          %s138 = smul.addr %s137, 16
          %s139 = scalar_lea.vmem [#allocation2], %s138
          %s140 = smul.u32 2, %s25
          %s142 = ssub.s32 256, 256
          %143 = vsyncadd %s136, %s142
          %s144 = smul.addr %s24, 2
          %s145 = sadd.s32 %s140, %s144
          %s146 = smul.addr %s145, 128
          %s147 = scalar_lea.hbm %s0, %s146
          %s149 = sshll.u32 %s139, 4
          %s150 = int_to_ptr.vmem [resolvable:$true] %s149
          %152 = dma.hbm_to_vmem [thread:$0]  %s147, 256, %s150, %s136
        $region20: #{tpu_custom_call.1} parent=15 // pred_fallthru
          _
        // Predicated region
        $region21: #{tpu_custom_call.1} parent=15 // pred_check
          %p153 = pneg %p79
        $region22: #{tpu_custom_call.1} parent=15 // pred_check_branch
          %155 = sbr.rel (%p153) target = $region24
        $region23: #{tpu_custom_call.1} parent=15 // pred_region
          %s156 = sand.u32 %s69, 1
          %s157 = scalar_lea.sflag [#allocation6], %s156
          %s158 = sand.u32 %s69, 1
          %s159 = smul.addr %s158, 32
          %s160 = scalar_lea.vmem [#allocation5], %s159
          %s161 = smul.u32 2, %s25
          %s163 = ssub.s32 512, 512
          %164 = vsyncadd %s157, %s163
          %s165 = smul.addr %s24, 4
          %s166 = sadd.s32 %s161, %s165
          %s167 = smul.addr %s166, 128
          %s168 = scalar_lea.hbm %s1, %s167
          %s169 = sshll.u32 %s160, 4
          %s170 = int_to_ptr.vmem [resolvable:$true] %s169
          %175 = dma.hbm_to_vmem [thread:$0]  %s168, 512, %s170, %s157, 256, 256, 16
        $region24: #{tpu_custom_call.1} parent=15 // pred_fallthru
          _
      $region16: #{tpu_custom_call.1} parent=5 // pred_fallthru
        _
      %p176 = scmp.le.s32.totalorder 1, %s17
      %p177 = scmp.lt.s32.totalorder %s17, 3
      %p178 = pnand %p176, %p177
      %p179 = pneg %p178
      // Predicated region
      $region25: #{tpu_custom_call.1} parent=5 // pred_check
        _
      $region26: #{tpu_custom_call.1} parent=5 // pred_check_branch
        %181 = sbr.rel (%p178) target = $region28
      $region27: #{tpu_custom_call.1} parent=5 // pred_region
        %s182 = ssub.s32 %s17, 1
        %s183 = sand.u32 %s44, 1
        %s184 = scalar_lea.sflag [#allocation3], %s183
        %s185 = sand.u32 %s44, 1
        %s186 = smul.addr %s185, 16
        %s187 = scalar_lea.vmem [#allocation2], %s186
        // Predicated region
        $region29: #{tpu_custom_call.1} parent=27 // pred_check
          %p188 = pneg %p57
        $region30: #{tpu_custom_call.1} parent=27 // pred_check_branch
          %190 = sbr.rel (%p188) target = $region32
        $region31: #{tpu_custom_call.1} parent=27 // pred_region
          %191 = dma.done %s184, 256
        $region32: #{tpu_custom_call.1} parent=27 // pred_fallthru
          _
        %s192 = sand.u32 %s72, 1
        %s193 = scalar_lea.sflag [#allocation6], %s192
        %s194 = sand.u32 %s72, 1
        %s195 = smul.addr %s194, 32
        %s196 = scalar_lea.vmem [#allocation5], %s195
        // Predicated region
        $region33: #{tpu_custom_call.1} parent=27 // pred_check
          %p197 = pneg %p85
        $region34: #{tpu_custom_call.1} parent=27 // pred_check_branch
          %199 = sbr.rel (%p197) target = $region36
        $region35: #{tpu_custom_call.1} parent=27 // pred_region
          %200 = dma.done %s193, 512
        $region36: #{tpu_custom_call.1} parent=27 // pred_fallthru
          _
        %s201 = sand.u32 %s44, 1
        %s202 = scalar_lea.sflag [#allocation3], %s201
        %s203 = sand.u32 %s44, 1
        %s204 = smul.addr %s203, 16
        %s205 = scalar_lea.vmem [#allocation2], %s204
        %p206 = pneg %p57
        %p207 = pneg %p54
        %s208 = sand.u32 %s72, 1
        %s209 = scalar_lea.sflag [#allocation6], %s208
        %s210 = sand.u32 %s72, 1
        %s211 = smul.addr %s210, 32
        %s212 = scalar_lea.vmem [#allocation5], %s211
        %p213 = pneg %p85
        %p214 = pneg %p82
        %p215 = pneg %p113
        %p216 = pneg %p110
        %s217 = sand.u32 %s100, 1
        %s218 = scalar_lea.sflag [#allocation4], %s217
        %s219 = sand.u32 %s100, 1
        %s220 = smul.addr %s219, 48
        %s221 = scalar_lea.vmem [#allocation7], %s220
        %s222 = smul.u32 2, %s27
        %s223 = smul.u32 2, %s27
        %s224 = smul.u32 2, %s27
        %v225 = vld [vmem:[%s187] sm:$0xff]
        %v226 = vld [vmem:[%s187 + $0x8] sm:$0xff]
        %227 = vst [vmem:[%s221] sm:$0xff] %v225
        %228 = vst [vmem:[%s221 + $0x8] sm:$0xff] %v226
        %v229 = vld [vmem:[%s196] sm:$0xff]
        %v230 = vld [vmem:[%s196 + $0x8] sm:$0xff]
        %v231 = vld [vmem:[%s196 + $0x10] sm:$0xff]
        %v232 = vld [vmem:[%s196 + $0x18] sm:$0xff]
        %233 = vst [vmem:[%s221 + $0x10] sm:$0xff] %v229
        %234 = vst [vmem:[%s221 + $0x18] sm:$0xff] %v230
        %235 = vst [vmem:[%s221 + $0x20] sm:$0xff] %v231
        %236 = vst [vmem:[%s221 + $0x28] sm:$0xff] %v232
        %s237 = sand.u32 %s100, 1
        %s238 = scalar_lea.sflag [#allocation4], %s237
        %s239 = sand.u32 %s100, 1
        %s240 = smul.addr %s239, 48
        %s241 = scalar_lea.vmem [#allocation7], %s240
        // Predicated region
        $region37: #{tpu_custom_call.1} parent=27 // pred_check
          %p242 = pneg %p110
        $region38: #{tpu_custom_call.1} parent=27 // pred_check_branch
          %244 = sbr.rel (%p242) target = $region40
        $region39: #{tpu_custom_call.1} parent=27 // pred_region
          %s245 = smul.u32 2, %s27
          %s247 = ssub.s32 768, 768
          %248 = vsyncadd %s238, %s247
          %s249 = smul.addr %s26, 6
          %s250 = sadd.s32 %s245, %s249
          %s251 = smul.addr %s250, 128
          %s252 = scalar_lea.hbm %s2, %s251
          %s253 = sshll.u32 %s241, 4
          %s254 = int_to_ptr.vmem [resolvable:$true] %s253
          %259 = dma.vmem_to_hbm [thread:$0]  %s254, 768, %s252, %s238, 256, 256, 16
        $region40: #{tpu_custom_call.1} parent=27 // pred_fallthru
          _
      $region28: #{tpu_custom_call.1} parent=5 // pred_fallthru
        _
      %p260 = scmp.le.s32.totalorder 2, %s17
      // Predicated region
      $region41: #{tpu_custom_call.1} parent=5 // pred_check
        %p261 = pneg %p260
      $region42: #{tpu_custom_call.1} parent=5 // pred_check_branch
        %263 = sbr.rel (%p261) target = $region44
      $region43: #{tpu_custom_call.1} parent=5 // pred_region
        %s264 = ssub.s32 %s17, 2
        // Predicated region
        $region45: #{tpu_custom_call.1} parent=43 // pred_check
          %p265 = pneg %p116
        $region46: #{tpu_custom_call.1} parent=43 // pred_check_branch
          %267 = sbr.rel (%p265) target = $region48
        $region47: #{tpu_custom_call.1} parent=43 // pred_region
          %s268 = sand.u32 %s101, 1
          %s269 = scalar_lea.sflag [#allocation4], %s268
          %s270 = sand.u32 %s101, 1
          %s271 = smul.addr %s270, 48
          %s272 = scalar_lea.vmem [#allocation7], %s271
          %273 = dma.done %s269, 768
        $region48: #{tpu_custom_call.1} parent=43 // pred_fallthru
          _
      $region44: #{tpu_custom_call.1} parent=5 // pred_fallthru
        _
    $region6: #{tpu_custom_call.1} parent=1 // loop_footer
      %s21 = sadd.s32 1, %s17
    $region7: #{tpu_custom_call.1} parent=1 // loop_footer_branch
      %16 = sbr.rel target = $region3
    $region8: #{tpu_custom_call.1} parent=1 // loop_exit
      _
    %274 = vsyncpa [#allocation3], 1
    %s275 = scalar_lea.sflag [#allocation3], 1
    %276 = vsyncpa %s275, 1
    %277 = vsyncpa [#allocation6], 1
    %s278 = scalar_lea.sflag [#allocation6], 1
    %279 = vsyncpa %s278, 1
    %280 = vsyncpa [#allocation4], 1
    %s281 = scalar_lea.sflag [#allocation4], 1
    %282 = vsyncpa %s281, 1

</llo_original>
